<compile_context>
chip_gen: v7x
topology: tpu7x:2x2x1
jax: 0.10.0
libtpu: 0.0.40
codegen_flags: <defaults>
</compile_context>

<pallas_src>
import math
from functools import partial

import jax
import jax.numpy as jnp
from jax.experimental import pallas as pl
from jax.experimental.pallas import tpu as pltpu

BN_EPS = 1e-5


def _round_up(x, m):
    return (x + m - 1) // m * m


# --------------------------------------------------------------------------
# Generation-aware tiling policy
# --------------------------------------------------------------------------
def _detect_gen():
    try:
        kind = jax.devices()[0].device_kind.lower()
    except Exception:
        return "unknown"
    if "v7" in kind or "7x" in kind:
        return "v7x"
    if "v6" in kind:
        return "v6e"
    if "v5 lite" in kind or "v5e" in kind or "v5lite" in kind:
        return "v5e"
    return "unknown"


_GEN = _detect_gen()

if _GEN == "v5e":
    # 4x128^2 MXU: 256-wide tiles buy nothing; keep TN narrow, grow TM.
    _MAX_TM, _MAX_TN, _MAX_TK = 1024, 128, 1024
    _VMEM_LIMIT = None          # stays inside the 16 MiB scoped default
    _MIN_PARALLEL_BLOCKS = 1
elif _GEN == "v7x":
    # 64 MiB VMEM / TC; 2 TensorCores -> need >=2 blocks on a parallel axis.
    _MAX_TM, _MAX_TN, _MAX_TK = 1024, 512, 2304
    _VMEM_LIMIT = 48 * 1024 * 1024
    _MIN_PARALLEL_BLOCKS = 2
elif _GEN == "v6e":
    _MAX_TM, _MAX_TN, _MAX_TK = 1024, 512, 2304
    _VMEM_LIMIT = 64 * 1024 * 1024
    _MIN_PARALLEL_BLOCKS = 1
else:  # unknown generation: conservative tiles that fit every scoped default
    _MAX_TM, _MAX_TN, _MAX_TK = 512, 256, 2304
    _VMEM_LIMIT = None
    _MIN_PARALLEL_BLOCKS = 1


def _plan_rows(m):
    """(Mp, TM): padded row count + row tile.  Prefers an exact divisor of
    round_up(m, 8) so no row padding / slicing copy is needed at all."""
    m8 = _round_up(m, 8)
    if m8 <= _MAX_TM:
        return m8, m8
    tm = _MAX_TM
    while m8 % tm:
        tm -= 8
    if tm >= _MAX_TM // 2:
        return m8, tm
    mp = _round_up(m8, _MAX_TM)
    return mp, _MAX_TM


def _choose_tn(np_):
    if np_ % 128 != 0:            # small channel count (64): single full block
        return np_
    tn = min(np_, _MAX_TN)
    while np_ % tn:
        tn -= 128
    return tn


def _choose_tk(kp):
    if kp % 128 != 0:             # tight-padded K (152, 576, 64): full block
        return kp
    if kp <= _MAX_TK:
        return kp                 # single K step -> no accumulator re-reads
    tk = _MAX_TK
    while kp % tk:
        tk -= 128
    return tk


def _ensure_parallel_blocks(mp, tm, np_, tn):
    """On v7x make sure a parallel grid axis has >=2 blocks (feed both TCs)."""
    if _MIN_PARALLEL_BLOCKS <= 1:
        return tm, tn
    while (mp // tm) * (np_ // tn) < _MIN_PARALLEL_BLOCKS:
        if tn % 256 == 0:
            tn //= 2
        elif tm % 16 == 0 and tm > 8:
            tm //= 2
        else:
            break
    return tm, tn


# --------------------------------------------------------------------------
# Pallas kernels
# --------------------------------------------------------------------------
def _mm_kernel(x_ref, w_ref, b_ref, o_ref, acc_ref, *, relu):
    # k == 0: seed the f32 accumulator with the folded-BN bias (no zero fill,
    # no extra epilogue add).
    @pl.when(pl.program_id(2) == 0)
    def _():
        acc_ref[...] = jnp.broadcast_to(b_ref[...], acc_ref.shape)

    acc_ref[...] += jnp.dot(x_ref[...], w_ref[...],
                            preferred_element_type=jnp.float32)

    @pl.when(pl.program_id(2) == pl.num_programs(2) - 1)
    def _():
        out = acc_ref[...]
        if relu:
            out = jnp.maximum(out, 0.0)
        o_ref[...] = out.astype(o_ref.dtype)


def _mm_res_kernel(x_ref, w_ref, b_ref, r_ref, o_ref, acc_ref, *, relu):
    @pl.when(pl.program_id(2) == 0)
    def _():
        acc_ref[...] = jnp.broadcast_to(b_ref[...], acc_ref.shape)

    acc_ref[...] += jnp.dot(x_ref[...], w_ref[...],
                            preferred_element_type=jnp.float32)

    @pl.when(pl.program_id(2) == pl.num_programs(2) - 1)
    def _():
        out = acc_ref[...] + r_ref[...].astype(jnp.float32)
        if relu:
            out = jnp.maximum(out, 0.0)
        o_ref[...] = out.astype(o_ref.dtype)


def _maxpool9_kernel(x_ref, o_ref):
    m = x_ref[0]
    for t in range(1, 9):
        m = jnp.maximum(m, x_ref[t])
    o_ref[...] = m


def _avgpool_kernel(x_ref, o_ref, *, inv):
    o_ref[...] = jnp.sum(x_ref[...].astype(jnp.float32), axis=1) * inv


# --------------------------------------------------------------------------
# Pallas call wrappers (NOT jitted themselves; traced inside the block jits)
# --------------------------------------------------------------------------
def _matmul_bias(xp, wp, bp, tm, relu):
    """xp:(Mp,Kp) bf16, wp:(Kp,Np) bf16, bp:(1,Np) f32 -> (Mp,Np) bf16."""
    mp, kp = xp.shape
    np_ = wp.shape[1]
    tn = _choose_tn(np_)
    tk = _choose_tk(kp)
    tm, tn = _ensure_parallel_blocks(mp, tm, np_, tn)
    return pl.pallas_call(
        partial(_mm_kernel, relu=relu),
        out_shape=jax.ShapeDtypeStruct((mp, np_), jnp.bfloat16),
        grid_spec=pltpu.PrefetchScalarGridSpec(
            num_scalar_prefetch=0,
            grid=(mp // tm, np_ // tn, kp // tk),
            in_specs=[
                pl.BlockSpec((tm, tk), lambda i, j, k: (i, k)),
                pl.BlockSpec((tk, tn), lambda i, j, k: (k, j)),
                pl.BlockSpec((1, tn), lambda i, j, k: (0, j)),
            ],
            out_specs=pl.BlockSpec((tm, tn), lambda i, j, k: (i, j)),
            scratch_shapes=[pltpu.VMEM((tm, tn), jnp.float32)],
        ),
        compiler_params=pltpu.CompilerParams(
            dimension_semantics=("parallel", "parallel", "arbitrary"),
            vmem_limit_bytes=_VMEM_LIMIT),
    )(xp, wp, bp)


def _matmul_bias_res(xp, wp, bp, rp, tm, relu):
    """Same as _matmul_bias but fuses the residual add before the ReLU."""
    mp, kp = xp.shape
    np_ = wp.shape[1]
    tn = _choose_tn(np_)
    tk = _choose_tk(kp)
    tm, tn = _ensure_parallel_blocks(mp, tm, np_, tn)
    return pl.pallas_call(
        partial(_mm_res_kernel, relu=relu),
        out_shape=jax.ShapeDtypeStruct((mp, np_), jnp.bfloat16),
        grid_spec=pltpu.PrefetchScalarGridSpec(
            num_scalar_prefetch=0,
            grid=(mp // tm, np_ // tn, kp // tk),
            in_specs=[
                pl.BlockSpec((tm, tk), lambda i, j, k: (i, k)),
                pl.BlockSpec((tk, tn), lambda i, j, k: (k, j)),
                pl.BlockSpec((1, tn), lambda i, j, k: (0, j)),
                pl.BlockSpec((tm, tn), lambda i, j, k: (i, j)),
            ],
            out_specs=pl.BlockSpec((tm, tn), lambda i, j, k: (i, j)),
            scratch_shapes=[pltpu.VMEM((tm, tn), jnp.float32)],
        ),
        compiler_params=pltpu.CompilerParams(
            dimension_semantics=("parallel", "parallel", "arbitrary"),
            vmem_limit_bytes=_VMEM_LIMIT),
    )(xp, wp, bp, rp)


# --------------------------------------------------------------------------
# Glue: im2col, conv wrapper, pooling wrappers
# --------------------------------------------------------------------------
def _im2col(x, kh, kw, stride, pad):
    """x: (B,H,W,C) NHWC -> patches (B*Ho*Wo, kh*kw*C) in (kh,kw,C) order."""
    B, H, W, C = x.shape
    Ho = (H + 2 * pad - kh) // stride + 1
    Wo = (W + 2 * pad - kw) // stride + 1
    if kh == 1 and kw == 1 and pad == 0:
        # 1x1 conv: im2col is a pure (strided) reshape -- no HBM expansion.
        if stride > 1:
            x = x[:, ::stride, ::stride, :]
        return x.reshape(B * Ho * Wo, C), Ho, Wo
    # TODO(synk): fuse the 3x3/7x7 patch gather into the matmul kernel
    # (shifted-slab index_map / manual DMA) to avoid the 9x im2col HBM
    # expansion; only 3x3/7x7 convs reach this path now.
    xp = jnp.pad(x, ((0, 0), (pad, pad), (pad, pad), (0, 0)))
    cols = [xp[:, i:i + (Ho - 1) * stride + 1:stride,
               j:j + (Wo - 1) * stride + 1:stride, :]
            for i in range(kh) for j in range(kw)]
    patches = jnp.concatenate(cols, axis=-1)  # (B, Ho, Wo, kh*kw*C)
    return patches.reshape(B * Ho * Wo, kh * kw * C), Ho, Wo


def conv_bn_act(x, w, b, cfg, relu=True, residual=None):
    """Fused conv + folded-BN (+ residual) (+ ReLU) via one tiled Pallas matmul."""
    kh, kw, stride, pad, _ = cfg
    B = x.shape[0]
    patches, Ho, Wo = _im2col(x, kh, kw, stride, pad)
    M, K = patches.shape
    Kp, Np = w.shape
    Mp, tm = _plan_rows(M)

    xp = patches
    if Mp != M or Kp != K:
        xp = jnp.pad(xp, ((0, Mp - M), (0, Kp - K)))

    if residual is not None:
        r = residual.reshape(M, Np)
        if Mp != M:
            r = jnp.pad(r, ((0, Mp - M), (0, 0)))
        out = _matmul_bias_res(xp, w, b, r, tm, relu)
    else:
        out = _matmul_bias(xp, w, b, tm, relu)

    if Mp != M:
        out = out[:M]
    return out.reshape(B, Ho, Wo, Np)


def maxpool_3x3_s2_p1(x):
    # TODO(synk): gather the 9 pool taps in-kernel from the padded conv1
    # output instead of materializing a (9, M, C) stack in HBM (runs once per
    # forward, so this is a minor cost).
    B, H, W, C = x.shape
    s, pad = 2, 1
    xp = jnp.pad(x, ((0, 0), (pad, pad), (pad, pad), (0, 0)),
                 constant_values=-jnp.inf)
    Ho = (H + 2 * pad - 3) // s + 1
    Wo = (W + 2 * pad - 3) // s + 1
    taps = [xp[:, i:i + (Ho - 1) * s + 1:s, j:j + (Wo - 1) * s + 1:s, :]
            for i in range(3) for j in range(3)]
    stacked = jnp.stack(taps, axis=0).reshape(9, B * Ho * Wo, C)
    M = B * Ho * Wo
    Mp, tmp = _plan_rows(M)
    if Mp != M:
        stacked = jnp.pad(stacked, ((0, 0), (0, Mp - M), (0, 0)))
    out = pl.pallas_call(
        _maxpool9_kernel,
        out_shape=jax.ShapeDtypeStruct((Mp, C), x.dtype),
        grid_spec=pltpu.PrefetchScalarGridSpec(
            num_scalar_prefetch=0,
            grid=(Mp // tmp,),
            in_specs=[pl.BlockSpec((9, tmp, C), lambda i: (0, i, 0))],
            out_specs=pl.BlockSpec((tmp, C), lambda i: (i, 0))),
        compiler_params=pltpu.CompilerParams(
            dimension_semantics=("parallel",)),
    )(stacked)
    if Mp != M:
        out = out[:M]
    return out.reshape(B, Ho, Wo, C)


def global_avgpool(x):
    """AdaptiveAvgPool2d((1,1)) + reshape -> (B, C) f32, single-block kernel."""
    B, H, W, C = x.shape
    HW = H * W
    HWp = _round_up(HW, 8)
    xr = x.reshape(B, HW, C)
    if HWp != HW:
        xr = jnp.pad(xr, ((0, 0), (0, HWp - HW), (0, 0)))
    # Final feature map is tiny (<= B x 56 x 2048 bf16): one block, no grid.
    return pl.pallas_call(
        partial(_avgpool_kernel, inv=1.0 / float(HW)),
        out_shape=jax.ShapeDtypeStruct((B, C), jnp.float32),
    )(xr)


# --------------------------------------------------------------------------
# Deterministic synthetic parameters (ResNet-152 topology, BN folded)
# --------------------------------------------------------------------------
def make_conv_bn(key, cin, cout, kh, kw, stride, pad):
    k1, k2, k3, k4, k5 = jax.random.split(key, 5)
    fan_in = cin * kh * kw
    w = jax.random.normal(k1, (cout, cin, kh, kw), jnp.float32) / math.sqrt(fan_in)
    gamma = 1.0 + 0.1 * jax.random.normal(k2, (cout,), jnp.float32)
    beta = 0.1 * jax.random.normal(k3, (cout,), jnp.float32)
    running_mean = 0.1 * jax.random.normal(k4, (cout,), jnp.float32)
    running_var = 1.0 + 0.1 * jax.random.uniform(k5, (cout,), jnp.float32)
    # eval-mode BN folded into conv weight/bias
    scale = gamma / jnp.sqrt(running_var + BN_EPS)
    w = w * scale[:, None, None, None]
    b = beta - running_mean * scale
    # (cout,cin,kh,kw) -> (kh,kw,cin,cout) -> (kh*kw*cin, cout), matches im2col
    K, N = kh * kw * cin, cout
    w_mat = jnp.transpose(w, (2, 3, 1, 0)).reshape(K, N)
    # K padded tight (multiple of 8) when not a multiple of 128; the matmul
    # then takes it as a single full-extent K block (conv1: 147 -> 152, not
    # 256 -- no MACs on zero columns).  N is never padded (64 uses a full
    # block), so activations carry their true channel counts.
    Kp = K if K % 128 == 0 else _round_up(K, 8)
    if Kp != K:
        w_mat = jnp.pad(w_mat, ((0, Kp - K), (0, 0)))
    # TODO(synk): int8 (v5e/v6e) / fp8 (v7x) weight quantization with per-
    # channel scales folded into the epilogue to halve weight HBM traffic.
    w_mat = w_mat.astype(jnp.bfloat16)
    b = b.reshape(1, N).astype(jnp.float32)
    return {"w": w_mat, "b": b, "cfg": (kh, kw, stride, pad, N)}


def make_bottleneck(key, cin, width, stride, downsample):
    k1, k2, k3, k4 = jax.random.split(key, 4)
    c1 = make_conv_bn(k1, cin, width, 1, 1, 1, 0)
    c2 = make_conv_bn(k2, width, width, 3, 3, stride, 1)
    c3 = make_conv_bn(k3, width, width * 4, 1, 1, 1, 0)
    ds = make_conv_bn(k4, cin, width * 4, 1, 1, stride, 0) if downsample else None
    arrays = ((c1["w"], c1["b"]), (c2["w"], c2["b"]), (c3["w"], c3["b"]),
              ((ds["w"], ds["b"]) if ds is not None else None))
    cfgs = (c1["cfg"], c2["cfg"], c3["cfg"],
            (ds["cfg"] if ds is not None else None))
    return {"arrays": arrays, "cfgs": cfgs}


def make_layer(key, cin, width, n_blocks, stride):
    keys = jax.random.split(key, n_blocks)
    blocks = [make_bottleneck(keys[0], cin, width, stride, True)]
    for i in range(1, n_blocks):
        blocks.append(make_bottleneck(keys[i], width * 4, width, 1, False))
    return blocks


def make_encoder_params(key):
    k0, k1, k2, k3, k4 = jax.random.split(key, 5)
    return {
        "conv1": make_conv_bn(k0, 3, 64, 7, 7, stride=2, pad=3),
        "layer1": make_layer(k1, 64, 64, 3, stride=1),
        "layer2": make_layer(k2, 256, 128, 8, stride=2),
        "layer3": make_layer(k3, 512, 256, 36, stride=2),
        "layer4": make_layer(k4, 1024, 512, 3, stride=2),
    }


# --------------------------------------------------------------------------
# Jitted stages: stem (conv1+maxpool), bottleneck block, avg-pool head.
# Identical-shaped blocks (e.g. the 35 repeat blocks of layer3) hit the jit
# cache, so the whole ResNet-152 needs only ~10 compiled executables while
# all pad/reshape/slice glue fuses inside each one.
# --------------------------------------------------------------------------
def _stem_impl(images_nchw, w, b, cfg):
    # NCHW (torch layout) -> NHWC, bf16 activations for the whole backbone.
    x = jnp.transpose(images_nchw.astype(jnp.bfloat16), (0, 2, 3, 1))
    x = conv_bn_act(x, w, b, cfg, relu=True)
    return maxpool_3x3_s2_p1(x)


def _bottleneck_impl(x, arrays, cfgs):
    (w1, b1), (w2, b2), (w3, b3), ds = arrays
    c1, c2, c3, cd = cfgs
    identity = x
    out = conv_bn_act(x, w1, b1, c1, relu=True)
    out = conv_bn_act(out, w2, b2, c2, relu=True)
    if cd is not None:
        wd, bd = ds
        identity = conv_bn_act(x, wd, bd, cd, relu=False)
    # conv3 + BN + residual add + ReLU fused in one kernel epilogue.
    return conv_bn_act(out, w3, b3, c3, relu=True, residual=identity)


_stem_fwd = jax.jit(_stem_impl, static_argnames=("cfg",))
_bottleneck_fwd = jax.jit(_bottleneck_impl, static_argnames=("cfgs",))
_head_fwd = jax.jit(global_avgpool)


def encoder_forward(params, images_nchw):
    """Matches torch EncoderCNN.forward: resnet152 backbone -> (B, 2048)."""
    c1 = params["conv1"]
    x = _stem_fwd(images_nchw, c1["w"], c1["b"], cfg=c1["cfg"])
    for name in ("layer1", "layer2", "layer3", "layer4"):
        for blk in params[name]:
            x = _bottleneck_fwd(x, blk["arrays"], cfgs=blk["cfgs"])
    return _head_fwd(x)   # (B, 2048) f32


# --------------------------------------------------------------------------
if __name__ == "__main__":
    key = jax.random.PRNGKey(0)
    pkey, xkey = jax.random.split(key)

    params = make_encoder_params(pkey)
    images = jax.random.normal(xkey, (2, 3, 16, 16), jnp.float32)  # NCHW

    feats = encoder_forward(params, images)
    feats = jax.block_until_ready(feats)

    assert feats.shape == (2, 2048), feats.shape
    assert bool(jnp.all(jnp.isfinite(feats)))
    print("KERNEL_OK")
</pallas_src>

<mosaic_0001>
module attributes {stable_mosaic.version = 11 : i64} {
  func.func @_mm_kernel(%arg0: i32, %arg1: i32, %arg2: i32, %arg3: memref<128x152xbf16, #tpu.memory_space<vmem>>, %arg4: memref<152x64xbf16, #tpu.memory_space<vmem>>, %arg5: memref<1x64xf32, #tpu.memory_space<vmem>>, %arg6: memref<128x64xbf16, #tpu.memory_space<vmem>>, %arg7: memref<128x64xf32, #tpu.memory_space<vmem>>) attributes {dimension_semantics = [#tpu.dimension_semantics<parallel>, #tpu.dimension_semantics<parallel>, #tpu.dimension_semantics<arbitrary>], iteration_bounds = array<i64: 1, 1, 1>, scalar_prefetch = 0 : i64, scratch_operands = 1 : i64, tpu.core_type = #tpu.core_type<tc>, window_params = [{transform_indices = @transform_0, window_bounds = array<i64: 128, 152>}, {transform_indices = @transform_1, window_bounds = array<i64: 152, 64>}, {transform_indices = @transform_2, window_bounds = array<i64: 1, 64>}, {transform_indices = @transform_3, window_bounds = array<i64: 128, 64>}]} {
    %c0_i32 = arith.constant 0 : i32
    %0 = arith.cmpi eq, %arg2, %c0_i32 : i32
    %1 = arith.extui %0 : i1 to i32
    %c0_i32_0 = arith.constant 0 : i32
    %2 = arith.cmpi ne, %1, %c0_i32_0 : i32
    scf.if %2 {
      %c0_10 = arith.constant 0 : index
      %c0_11 = arith.constant 0 : index
      %12 = vector.load %arg5[%c0_10, %c0_11] : memref<1x64xf32, #tpu.memory_space<vmem>>, vector<1x64xf32>
      %13 = vector.shape_cast %12 : vector<1x64xf32> to vector<1x64xf32>
      %14 = vector.broadcast %13 : vector<1x64xf32> to vector<128x64xf32>
      %c0_12 = arith.constant 0 : index
      %c0_13 = arith.constant 0 : index
      %15 = vector.load %arg7[%c0_12, %c0_13] : memref<128x64xf32, #tpu.memory_space<vmem>>, vector<128x64xf32>
      tpu.vector_store %arg7[%c0_12, %c0_13], %14 {strides = array<i32>} : memref<128x64xf32, #tpu.memory_space<vmem>>, vector<128x64xf32>,
    } else {
    }
    %c0 = arith.constant 0 : index
    %c0_1 = arith.constant 0 : index
    %3 = vector.load %arg7[%c0, %c0_1] : memref<128x64xf32, #tpu.memory_space<vmem>>, vector<128x64xf32>
    %c0_2 = arith.constant 0 : index
    %c0_3 = arith.constant 0 : index
    %4 = vector.load %arg3[%c0_2, %c0_3] : memref<128x152xbf16, #tpu.memory_space<vmem>>, vector<128x152xbf16>
    %c0_4 = arith.constant 0 : index
    %c0_5 = arith.constant 0 : index
    %5 = vector.load %arg4[%c0_4, %c0_5] : memref<152x64xbf16, #tpu.memory_space<vmem>>, vector<152x64xbf16>
    %cst = arith.constant dense<0.000000e+00> : vector<128x64xf32>
    %6 = tpu.matmul %4, %5, %cst {dimension_numbers = #tpu.dot_dimension_numbers<[1], [0], [0], [1], [0, 0, 1, 1], [], []>} : vector<128x152xbf16>, vector<152x64xbf16>, vector<128x64xf32> -> vector<128x64xf32>
    %7 = arith.addf %3, %6 : vector<128x64xf32>
    %c0_6 = arith.constant 0 : index
    %c0_7 = arith.constant 0 : index
    %8 = vector.load %arg7[%c0_6, %c0_7] : memref<128x64xf32, #tpu.memory_space<vmem>>, vector<128x64xf32>
    tpu.vector_store %arg7[%c0_6, %c0_7], %7 {strides = array<i32>} : memref<128x64xf32, #tpu.memory_space<vmem>>, vector<128x64xf32>,
    %c0_i32_8 = arith.constant 0 : i32
    %9 = arith.cmpi eq, %arg2, %c0_i32_8 : i32
    %10 = arith.extui %9 : i1 to i32
    %c0_i32_9 = arith.constant 0 : i32
    %11 = arith.cmpi ne, %10, %c0_i32_9 : i32
    scf.if %11 {
      %c0_10 = arith.constant 0 : index
      %c0_11 = arith.constant 0 : index
      %12 = vector.load %arg7[%c0_10, %c0_11] : memref<128x64xf32, #tpu.memory_space<vmem>>, vector<128x64xf32>
      %cst_12 = arith.constant 0.000000e+00 : f32
      %13 = vector.broadcast %cst_12 : f32 to vector<128x64xf32>
      %14 = arith.maximumf %12, %13 : vector<128x64xf32>
      %15 = arith.truncf %14 : vector<128x64xf32> to vector<128x64xbf16>
      %c0_13 = arith.constant 0 : index
      %c0_14 = arith.constant 0 : index
      %16 = vector.load %arg6[%c0_13, %c0_14] : memref<128x64xbf16, #tpu.memory_space<vmem>>, vector<128x64xbf16>
      tpu.vector_store %arg6[%c0_13, %c0_14], %15 {strides = array<i32>} : memref<128x64xbf16, #tpu.memory_space<vmem>>, vector<128x64xbf16>,
    } else {
    }
    return
  }
  func.func @transform_0(%arg0: i32, %arg1: i32, %arg2: i32) -> (i32, i32) {
    %c0_i32 = arith.constant 0 : i32
    return %arg0, %arg2 : i32, i32
  }
  func.func @transform_1(%arg0: i32, %arg1: i32, %arg2: i32) -> (i32, i32) {
    %c0_i32 = arith.constant 0 : i32
    return %arg2, %arg1 : i32, i32
  }
  func.func @transform_2(%arg0: i32, %arg1: i32, %arg2: i32) -> (i32, i32) {
    %c0_i32 = arith.constant 0 : i32
    %c0_i32_0 = arith.constant 0 : i32
    return %c0_i32, %arg1 : i32, i32
  }
  func.func @transform_3(%arg0: i32, %arg1: i32, %arg2: i32) -> (i32, i32) {
    %c0_i32 = arith.constant 0 : i32
    return %arg0, %arg1 : i32, i32
  }
}

module attributes {stable_mosaic.version = 11 : i64} {
  func.func @_maxpool9_kernel(%arg0: i32, %arg1: memref<9x32x64xbf16, #tpu.memory_space<vmem>>, %arg2: memref<32x64xbf16, #tpu.memory_space<vmem>>) attributes {dimension_semantics = [#tpu.dimension_semantics<parallel>], iteration_bounds = array<i64: 1>, scalar_prefetch = 0 : i64, scratch_operands = 0 : i64, tpu.core_type = #tpu.core_type<tc>, window_params = [{transform_indices = @transform_0, window_bounds = array<i64: 9, 32, 64>}, {transform_indices = @transform_1, window_bounds = array<i64: 32, 64>}]} {
    %c0 = arith.constant 0 : index
    %c0_0 = arith.constant 0 : index
    %c0_1 = arith.constant 0 : index
    %0 = vector.load %arg1[%c0, %c0_0, %c0_1] : memref<9x32x64xbf16, #tpu.memory_space<vmem>>, vector<1x32x64xbf16>
    %1 = vector.shape_cast %0 : vector<1x32x64xbf16> to vector<32x64xbf16>
    %c1 = arith.constant 1 : index
    %c0_2 = arith.constant 0 : index
    %c0_3 = arith.constant 0 : index
    %2 = vector.load %arg1[%c1, %c0_2, %c0_3] : memref<9x32x64xbf16, #tpu.memory_space<vmem>>, vector<1x32x64xbf16>
    %3 = vector.shape_cast %2 : vector<1x32x64xbf16> to vector<32x64xbf16>
    %4 = arith.maximumf %1, %3 : vector<32x64xbf16>
    %c2 = arith.constant 2 : index
    %c0_4 = arith.constant 0 : index
    %c0_5 = arith.constant 0 : index
    %5 = vector.load %arg1[%c2, %c0_4, %c0_5] : memref<9x32x64xbf16, #tpu.memory_space<vmem>>, vector<1x32x64xbf16>
    %6 = vector.shape_cast %5 : vector<1x32x64xbf16> to vector<32x64xbf16>
    %7 = arith.maximumf %4, %6 : vector<32x64xbf16>
    %c3 = arith.constant 3 : index
    %c0_6 = arith.constant 0 : index
    %c0_7 = arith.constant 0 : index
    %8 = vector.load %arg1[%c3, %c0_6, %c0_7] : memref<9x32x64xbf16, #tpu.memory_space<vmem>>, vector<1x32x64xbf16>
    %9 = vector.shape_cast %8 : vector<1x32x64xbf16> to vector<32x64xbf16>
    %10 = arith.maximumf %7, %9 : vector<32x64xbf16>
    %c4 = arith.constant 4 : index
    %c0_8 = arith.constant 0 : index
    %c0_9 = arith.constant 0 : index
    %11 = vector.load %arg1[%c4, %c0_8, %c0_9] : memref<9x32x64xbf16, #tpu.memory_space<vmem>>, vector<1x32x64xbf16>
    %12 = vector.shape_cast %11 : vector<1x32x64xbf16> to vector<32x64xbf16>
    %13 = arith.maximumf %10, %12 : vector<32x64xbf16>
    %c5 = arith.constant 5 : index
    %c0_10 = arith.constant 0 : index
    %c0_11 = arith.constant 0 : index
    %14 = vector.load %arg1[%c5, %c0_10, %c0_11] : memref<9x32x64xbf16, #tpu.memory_space<vmem>>, vector<1x32x64xbf16>
    %15 = vector.shape_cast %14 : vector<1x32x64xbf16> to vector<32x64xbf16>
    %16 = arith.maximumf %13, %15 : vector<32x64xbf16>
    %c6 = arith.constant 6 : index
    %c0_12 = arith.constant 0 : index
    %c0_13 = arith.constant 0 : index
    %17 = vector.load %arg1[%c6, %c0_12, %c0_13] : memref<9x32x64xbf16, #tpu.memory_space<vmem>>, vector<1x32x64xbf16>
    %18 = vector.shape_cast %17 : vector<1x32x64xbf16> to vector<32x64xbf16>
    %19 = arith.maximumf %16, %18 : vector<32x64xbf16>
    %c7 = arith.constant 7 : index
    %c0_14 = arith.constant 0 : index
    %c0_15 = arith.constant 0 : index
    %20 = vector.load %arg1[%c7, %c0_14, %c0_15] : memref<9x32x64xbf16, #tpu.memory_space<vmem>>, vector<1x32x64xbf16>
    %21 = vector.shape_cast %20 : vector<1x32x64xbf16> to vector<32x64xbf16>
    %22 = arith.maximumf %19, %21 : vector<32x64xbf16>
    %c8 = arith.constant 8 : index
    %c0_16 = arith.constant 0 : index
    %c0_17 = arith.constant 0 : index
    %23 = vector.load %arg1[%c8, %c0_16, %c0_17] : memref<9x32x64xbf16, #tpu.memory_space<vmem>>, vector<1x32x64xbf16>
    %24 = vector.shape_cast %23 : vector<1x32x64xbf16> to vector<32x64xbf16>
    %25 = arith.maximumf %22, %24 : vector<32x64xbf16>
    %c0_18 = arith.constant 0 : index
    %c0_19 = arith.constant 0 : index
    %26 = vector.load %arg2[%c0_18, %c0_19] : memref<32x64xbf16, #tpu.memory_space<vmem>>, vector<32x64xbf16>
    tpu.vector_store %arg2[%c0_18, %c0_19], %25 {strides = array<i32>} : memref<32x64xbf16, #tpu.memory_space<vmem>>, vector<32x64xbf16>,
    return
  }
  func.func @transform_0(%arg0: i32) -> (i32, i32, i32) {
    %c0_i32 = arith.constant 0 : i32
    %c0_i32_0 = arith.constant 0 : i32
    %c0_i32_1 = arith.constant 0 : i32
    return %c0_i32, %arg0, %c0_i32_0 : i32, i32, i32
  }
  func.func @transform_1(%arg0: i32) -> (i32, i32) {
    %c0_i32 = arith.constant 0 : i32
    %c0_i32_0 = arith.constant 0 : i32
    return %arg0, %c0_i32 : i32, i32
  }
}

</mosaic_0001>

<llo_original>
// kernel: _stem_impl.3
$region0: #{_stem_impl.3}
  #allocation0 [shape = 'u32[]', space=smem, size = 0x4, offset = 0x4, fixed_abs, tag = 'smem constant byte address 0x4 - core index']
  #allocation1 [shape = 'u32[144,128]{1,0:T(1,128)}', space=vmem, size = 0x12000, scoped, tag = 'internal scratch']
  %s0 = inlined_call_operand.vmem [shape: bf16[9,32,64], index: 0, kind: input, shape index: {}]
  %s1 = inlined_call_operand.hbm [shape: bf16[32,64], index: 1, kind: output, shape index: {}]
  %s2 = sld [smem:[#allocation0]]
  $region14: #{_stem_impl.3} parent=0
    _
  %s4 = ssub.s32 1, %s2
  %s5 = scalar_select 0, %s4, %s2
  $region1: #{_stem_impl.3} parent=0
    #allocation2 [shape = 'u8[8192]{0}', space=vmem, size = 0x2000, scoped, tag = 'output window, operand 0, single buffered']
    #allocation3 [shape = 's32[1]{0}', space=sflag, size = 0x4, scoped, tag = 'scoped memory for _stem_impl.3']
    %6 = vsyncpa [#allocation3], 0
    // Predicated region
    $region2: #{_stem_impl.3} parent=1 // pred_check
      _
    $region3: #{_stem_impl.3} parent=1 // pred_check_branch
      %8 = sbr.rel (0) target = $region5
    $region4: #{_stem_impl.3} parent=1 // pred_region
      _
    $region5: #{_stem_impl.3} parent=1 // pred_fallthru
      _
    %v9 = vld [vmem:[%s0] sm:$0xf]
    %v10 = vld [vmem:[%s0 + $0x4] sm:$0xf]
    %v11 = vld [vmem:[%s0 + $0x8] sm:$0xf]
    %v12 = vld [vmem:[%s0 + $0xc] sm:$0xf]
    %s13 = scalar_lea.vmem %s0, 16
    %v14 = vld [vmem:[%s13] sm:$0xf]
    %v15 = vld [vmem:[%s13 + $0x4] sm:$0xf]
    %v16 = vld [vmem:[%s13 + $0x8] sm:$0xf]
    %v17 = vld [vmem:[%s13 + $0xc] sm:$0xf]
    %v18 = vmax.bf16 %v9, %v14
    %v19 = vmax.bf16 %v10, %v15
    %v20 = vmax.bf16 %v11, %v16
    %v21 = vmax.bf16 %v12, %v17
    %s22 = scalar_lea.vmem %s0, 32
    %v23 = vld [vmem:[%s22] sm:$0xf]
    %v24 = vld [vmem:[%s22 + $0x4] sm:$0xf]
    %v25 = vld [vmem:[%s22 + $0x8] sm:$0xf]
    %v26 = vld [vmem:[%s22 + $0xc] sm:$0xf]
    %v27 = vmax.bf16 %v18, %v23
    %v28 = vmax.bf16 %v19, %v24
    %v29 = vmax.bf16 %v20, %v25
    %v30 = vmax.bf16 %v21, %v26
    %s31 = scalar_lea.vmem %s0, 48
    %v32 = vld [vmem:[%s31] sm:$0xf]
    %v33 = vld [vmem:[%s31 + $0x4] sm:$0xf]
    %v34 = vld [vmem:[%s31 + $0x8] sm:$0xf]
    %v35 = vld [vmem:[%s31 + $0xc] sm:$0xf]
    %v36 = vmax.bf16 %v27, %v32
    %v37 = vmax.bf16 %v28, %v33
    %v38 = vmax.bf16 %v29, %v34
    %v39 = vmax.bf16 %v30, %v35
    %s40 = scalar_lea.vmem %s0, 64
    %v41 = vld [vmem:[%s40] sm:$0xf]
    %v42 = vld [vmem:[%s40 + $0x4] sm:$0xf]
    %v43 = vld [vmem:[%s40 + $0x8] sm:$0xf]
    %v44 = vld [vmem:[%s40 + $0xc] sm:$0xf]
    %v45 = vmax.bf16 %v36, %v41
    %v46 = vmax.bf16 %v37, %v42
    %v47 = vmax.bf16 %v38, %v43
    %v48 = vmax.bf16 %v39, %v44
    %s49 = scalar_lea.vmem %s0, 80
    %v50 = vld [vmem:[%s49] sm:$0xf]
    %v51 = vld [vmem:[%s49 + $0x4] sm:$0xf]
    %v52 = vld [vmem:[%s49 + $0x8] sm:$0xf]
    %v53 = vld [vmem:[%s49 + $0xc] sm:$0xf]
    %v54 = vmax.bf16 %v45, %v50
    %v55 = vmax.bf16 %v46, %v51
    %v56 = vmax.bf16 %v47, %v52
    %v57 = vmax.bf16 %v48, %v53
    %s58 = scalar_lea.vmem %s0, 96
    %v59 = vld [vmem:[%s58] sm:$0xf]
    %v60 = vld [vmem:[%s58 + $0x4] sm:$0xf]
    %v61 = vld [vmem:[%s58 + $0x8] sm:$0xf]
    %v62 = vld [vmem:[%s58 + $0xc] sm:$0xf]
    %v63 = vmax.bf16 %v54, %v59
    %v64 = vmax.bf16 %v55, %v60
    %v65 = vmax.bf16 %v56, %v61
    %v66 = vmax.bf16 %v57, %v62
    %s67 = scalar_lea.vmem %s0, 112
    %v68 = vld [vmem:[%s67] sm:$0xf]
    %v69 = vld [vmem:[%s67 + $0x4] sm:$0xf]
    %v70 = vld [vmem:[%s67 + $0x8] sm:$0xf]
    %v71 = vld [vmem:[%s67 + $0xc] sm:$0xf]
    %v72 = vmax.bf16 %v63, %v68
    %v73 = vmax.bf16 %v64, %v69
    %v74 = vmax.bf16 %v65, %v70
    %v75 = vmax.bf16 %v66, %v71
    %s76 = scalar_lea.vmem %s0, 128
    %v77 = vld [vmem:[%s76] sm:$0xf]
    %v78 = vld [vmem:[%s76 + $0x4] sm:$0xf]
    %v79 = vld [vmem:[%s76 + $0x8] sm:$0xf]
    %v80 = vld [vmem:[%s76 + $0xc] sm:$0xf]
    %v81 = vmax.bf16 %v72, %v77
    %v82 = vmax.bf16 %v73, %v78
    %v83 = vmax.bf16 %v74, %v79
    %v84 = vmax.bf16 %v75, %v80
    %vm85 = vcmask 519168
    %86 = vst.msk [vmem:[#allocation2] sm:$0xf] %vm85, %v81
    %87 = vst.msk [vmem:[#allocation2 + $0x4] sm:$0xf] %vm85, %v82
    %88 = vst.msk [vmem:[#allocation2 + $0x8] sm:$0xf] %vm85, %v83
    %89 = vst.msk [vmem:[#allocation2 + $0xc] sm:$0xf] %vm85, %v84
    // Predicated region
    $region6: #{_stem_impl.3} parent=1 // pred_check
      _
    $region7: #{_stem_impl.3} parent=1 // pred_check_branch
      %91 = sbr.rel (0) target = $region9
    $region8: #{_stem_impl.3} parent=1 // pred_region
      %s93 = ssub.s32 256, 256
      %94 = vsyncadd [#allocation3], %s93
      %s95 = sshll.u32 [#allocation2], 4
      %s96 = int_to_ptr.vmem [resolvable:$true] %s95
      %101 = dma.vmem_to_hbm [thread:$0]  %s96, 256, %s1, [#allocation3], 64, 64, 4
    $region9: #{_stem_impl.3} parent=1 // pred_fallthru
      _
    // Predicated region
    $region10: #{_stem_impl.3} parent=1 // pred_check
      _
    $region11: #{_stem_impl.3} parent=1 // pred_check_branch
      %103 = sbr.rel (0) target = $region13
    $region12: #{_stem_impl.3} parent=1 // pred_region
      %104 = dma.done [#allocation3], 256
    $region13: #{_stem_impl.3} parent=1 // pred_fallthru
      _
    %105 = vsyncpa [#allocation3], 1

// kernel: _stem_impl.2
$region0: #{_stem_impl.2}
  #allocation0 [shape = 'u32[]', space=smem, size = 0x4, offset = 0x4, fixed_abs, tag = 'smem constant byte address 0x4 - core index']
  #allocation1 [shape = 'u32[144,128]{1,0:T(1,128)}', space=vmem, size = 0x12000, scoped, tag = 'internal scratch']
  #allocation2 [shape = 'f32[128,64]{1,0:T(8,128)}', space=vmem, size = 0x10000, scoped, tag = 'scratch operand']
  %s0 = inlined_call_operand.vmem [shape: bf16[128,152], index: 0, kind: input, shape index: {}]
  %s1 = inlined_call_operand.vmem [shape: bf16[152,64], index: 1, kind: input, shape index: {}]
  %s2 = inlined_call_operand.vmem [shape: f32[1,64], index: 2, kind: input, shape index: {}]
  %s3 = inlined_call_operand.vmem [shape: bf16[128,64], index: 3, kind: output, shape index: {}]
  %s4 = sld [smem:[#allocation0]]
  $region30: #{_stem_impl.2} parent=0
    _
  %s6 = ssub.s32 1, %s4
  %s7 = scalar_select 0, %s6, %s4
  // Predicated region
  $region2: #{_stem_impl.2} parent=0 // pred_check
    _
  $region3: #{_stem_impl.2} parent=0 // pred_check_branch
    %9 = sbr.rel (0) target = $region5
  $region4: #{_stem_impl.2} parent=0 // pred_region
    _
  $region5: #{_stem_impl.2} parent=0 // pred_fallthru
    _
  // Predicated region
  $region6: #{_stem_impl.2} parent=0 // pred_check
    _
  $region7: #{_stem_impl.2} parent=0 // pred_check_branch
    %11 = sbr.rel (0) target = $region9
  $region8: #{_stem_impl.2} parent=0 // pred_region
    _
  $region9: #{_stem_impl.2} parent=0 // pred_fallthru
    _
  // Predicated region
  $region10: #{_stem_impl.2} parent=0 // pred_check
    _
  $region11: #{_stem_impl.2} parent=0 // pred_check_branch
    %13 = sbr.rel (0) target = $region13
  $region12: #{_stem_impl.2} parent=0 // pred_region
    _
  $region13: #{_stem_impl.2} parent=0 // pred_fallthru
    _
  %p15 = scmp.eq.s32.totalorder 0, 0
  // Predicated region
  $region14: #{_stem_impl.2} parent=0 // pred_check
    %p16 = pneg %p15
  $region15: #{_stem_impl.2} parent=0 // pred_check_branch
    %18 = sbr.rel (%p16) target = $region17
  $region16: #{_stem_impl.2} parent=0 // pred_region
    %v19 = vld [vmem:[%s2] sm:$0x1]
    %v21 = vlaneseq
    %v22 = vshrl.u32 %v21, 7
    %v23 = vsub.s32 0, %v22
    %v24 = vrot.slane %v19, %v23
    %vm26 = vcmask 523264
    %27 = vst.msk [vmem:[#allocation2] sm:$0xff] %vm26, %v24
    %28 = vst.msk [vmem:[#allocation2 + $0x8] sm:$0xff] %vm26, %v24
    %29 = vst.msk [vmem:[#allocation2 + $0x10] sm:$0xff] %vm26, %v24
    %30 = vst.msk [vmem:[#allocation2 + $0x18] sm:$0xff] %vm26, %v24
    %31 = vst.msk [vmem:[#allocation2 + $0x20] sm:$0xff] %vm26, %v24
    %32 = vst.msk [vmem:[#allocation2 + $0x28] sm:$0xff] %vm26, %v24
    %33 = vst.msk [vmem:[#allocation2 + $0x30] sm:$0xff] %vm26, %v24
    %34 = vst.msk [vmem:[#allocation2 + $0x38] sm:$0xff] %vm26, %v24
    %35 = vst.msk [vmem:[#allocation2 + $0x40] sm:$0xff] %vm26, %v24
    %36 = vst.msk [vmem:[#allocation2 + $0x48] sm:$0xff] %vm26, %v24
    %37 = vst.msk [vmem:[#allocation2 + $0x50] sm:$0xff] %vm26, %v24
    %38 = vst.msk [vmem:[#allocation2 + $0x58] sm:$0xff] %vm26, %v24
    %39 = vst.msk [vmem:[#allocation2 + $0x60] sm:$0xff] %vm26, %v24
    %40 = vst.msk [vmem:[#allocation2 + $0x68] sm:$0xff] %vm26, %v24
    %41 = vst.msk [vmem:[#allocation2 + $0x70] sm:$0xff] %vm26, %v24
    %42 = vst.msk [vmem:[#allocation2 + $0x78] sm:$0xff] %vm26, %v24
  $region17: #{_stem_impl.2} parent=0 // pred_fallthru
    _
  %v43 = vld [vmem:[#allocation2] sm:$0xff]
  %v44 = vld [vmem:[#allocation2 + $0x8] sm:$0xff]
  %v45 = vld [vmem:[#allocation2 + $0x10] sm:$0xff]
  %v46 = vld [vmem:[#allocation2 + $0x18] sm:$0xff]
  %v47 = vld [vmem:[#allocation2 + $0x20] sm:$0xff]
  %v48 = vld [vmem:[#allocation2 + $0x28] sm:$0xff]
  %v49 = vld [vmem:[#allocation2 + $0x30] sm:$0xff]
  %v50 = vld [vmem:[#allocation2 + $0x38] sm:$0xff]
  %v51 = vld [vmem:[#allocation2 + $0x40] sm:$0xff]
  %v52 = vld [vmem:[#allocation2 + $0x48] sm:$0xff]
  %v53 = vld [vmem:[#allocation2 + $0x50] sm:$0xff]
  %v54 = vld [vmem:[#allocation2 + $0x58] sm:$0xff]
  %v55 = vld [vmem:[#allocation2 + $0x60] sm:$0xff]
  %v56 = vld [vmem:[#allocation2 + $0x68] sm:$0xff]
  %v57 = vld [vmem:[#allocation2 + $0x70] sm:$0xff]
  %v58 = vld [vmem:[#allocation2 + $0x78] sm:$0xff]
  %v59 = vld [vmem:[%s0] sm:$0xff]
  %v60 = vld [vmem:[%s0 + $0x8] sm:$0xff]
  %v61 = vld [vmem:[%s0 + $0x10] sm:$0xff]
  %v62 = vld [vmem:[%s0 + $0x18] sm:$0xff]
  %v63 = vld [vmem:[%s0 + $0x20] sm:$0xff]
  %v64 = vld [vmem:[%s0 + $0x28] sm:$0xff]
  %v65 = vld [vmem:[%s0 + $0x30] sm:$0xff]
  %v66 = vld [vmem:[%s0 + $0x38] sm:$0xff]
  %v67 = vld [vmem:[%s0 + $0x40] sm:$0xff]
  %v68 = vld [vmem:[%s0 + $0x48] sm:$0xff]
  %v69 = vld [vmem:[%s0 + $0x50] sm:$0xff]
  %v70 = vld [vmem:[%s0 + $0x58] sm:$0xff]
  %v71 = vld [vmem:[%s0 + $0x60] sm:$0xff]
  %v72 = vld [vmem:[%s0 + $0x68] sm:$0xff]
  %v73 = vld [vmem:[%s0 + $0x70] sm:$0xff]
  %v74 = vld [vmem:[%s0 + $0x78] sm:$0xff]
  %v75 = vld [vmem:[%s1] sm:$0xf]
  %v76 = vld [vmem:[%s1 + $0x4] sm:$0xf]
  %v77 = vld [vmem:[%s1 + $0x8] sm:$0xf]
  %v78 = vld [vmem:[%s1 + $0xc] sm:$0xf]
  %v79 = vld [vmem:[%s1 + $0x10] sm:$0xf]
  %v80 = vld [vmem:[%s1 + $0x14] sm:$0xf]
  %v81 = vld [vmem:[%s1 + $0x18] sm:$0xf]
  %v82 = vld [vmem:[%s1 + $0x1c] sm:$0xf]
  %v83 = vld [vmem:[%s1 + $0x20] sm:$0xf]
  %v84 = vld [vmem:[%s1 + $0x24] sm:$0xf]
  %v85 = vld [vmem:[%s1 + $0x28] sm:$0xf]
  %v86 = vld [vmem:[%s1 + $0x2c] sm:$0xf]
  %v87 = vld [vmem:[%s1 + $0x30] sm:$0xf]
  %v88 = vld [vmem:[%s1 + $0x34] sm:$0xf]
  %v89 = vld [vmem:[%s1 + $0x38] sm:$0xf]
  %v90 = vld [vmem:[%s1 + $0x3c] sm:$0xf]
  %v91 = vld [vmem:[%s1 + $0x40] sm:$0xf]
  %v92 = vld [vmem:[%s1 + $0x44] sm:$0xf]
  %v93 = vld [vmem:[%s1 + $0x48] sm:$0xf]
  %v110 = vunpack.c.l.b16 %v59
  %v111 = vunpack.c.h.b16 %v59
  %v112 = vunpack.c.l.b16 %v60
  %v113 = vunpack.c.h.b16 %v60
  %v114 = vunpack.c.l.b16 %v61
  %v115 = vunpack.c.h.b16 %v61
  %v116 = vunpack.c.l.b16 %v62
  %v117 = vunpack.c.h.b16 %v62
  %v118 = vunpack.c.l.b16 %v63
  %v119 = vunpack.c.h.b16 %v63
  %v120 = vunpack.c.l.b16 %v64
  %v121 = vunpack.c.h.b16 %v64
  %v122 = vunpack.c.l.b16 %v65
  %v123 = vunpack.c.h.b16 %v65
  %v124 = vunpack.c.l.b16 %v66
  %v125 = vunpack.c.h.b16 %v66
  %v126 = vunpack.c.l.b16 %v67
  %v127 = vunpack.c.h.b16 %v67
  %v128 = vunpack.c.l.b16 %v68
  %v129 = vunpack.c.h.b16 %v68
  %v130 = vunpack.c.l.b16 %v69
  %v131 = vunpack.c.h.b16 %v69
  %v132 = vunpack.c.l.b16 %v70
  %v133 = vunpack.c.h.b16 %v70
  %v134 = vunpack.c.l.b16 %v71
  %v135 = vunpack.c.h.b16 %v71
  %v136 = vunpack.c.l.b16 %v72
  %v137 = vunpack.c.h.b16 %v72
  %v138 = vunpack.c.l.b16 %v73
  %v139 = vunpack.c.h.b16 %v73
  %v140 = vunpack.c.l.b16 %v74
  %v141 = vunpack.c.h.b16 %v74
  %v142 = vpack.c.b16 %v112, %v110
  %v143 = vpack.c.b16 %v113, %v111
  %v144 = vpack.c.b16 %v116, %v114
  %v145 = vpack.c.b16 %v117, %v115
  %v146 = vpack.c.b16 %v120, %v118
  %v147 = vpack.c.b16 %v121, %v119
  %v148 = vpack.c.b16 %v124, %v122
  %v149 = vpack.c.b16 %v125, %v123
  %v150 = vpack.c.b16 %v128, %v126
  %v151 = vpack.c.b16 %v129, %v127
  %v152 = vpack.c.b16 %v132, %v130
  %v153 = vpack.c.b16 %v133, %v131
  %v154 = vpack.c.b16 %v136, %v134
  %v155 = vpack.c.b16 %v137, %v135
  %v156 = vpack.c.b16 %v140, %v138
  %v157 = vpack.c.b16 %v141, %v139
  %v185 = vunpack.c.l.b16 %v75
  %v186 = vunpack.c.l.b16 %v76
  %v187 = vunpack.c.l.b16 %v77
  %v188 = vunpack.c.l.b16 %v78
  %v189 = vunpack.c.l.b16 %v79
  %v190 = vunpack.c.l.b16 %v80
  %v191 = vunpack.c.l.b16 %v81
  %v192 = vunpack.c.l.b16 %v82
  %v193 = vunpack.c.l.b16 %v83
  %v194 = vunpack.c.l.b16 %v84
  %v195 = vunpack.c.l.b16 %v85
  %v196 = vunpack.c.l.b16 %v86
  %v197 = vunpack.c.l.b16 %v87
  %v198 = vunpack.c.l.b16 %v88
  %v199 = vunpack.c.l.b16 %v89
  %v200 = vunpack.c.l.b16 %v90
  %v201 = vunpack.c.l.b16 %v91
  %v202 = vunpack.c.l.b16 %v92
  %v203 = vunpack.c.l.b16 %v93
  %v204 = vpack.c.b16 %v186, %v185
  %v205 = vpack.c.b16 %v188, %v187
  %v206 = vpack.c.b16 %v190, %v189
  %v207 = vpack.c.b16 %v192, %v191
  %v208 = vpack.c.b16 %v194, %v193
  %v209 = vpack.c.b16 %v196, %v195
  %v210 = vpack.c.b16 %v198, %v197
  %v211 = vpack.c.b16 %v200, %v199
  %v212 = vpack.c.b16 %v202, %v201
  %v213 = vpack.c.b16 %v203, %v203
  %vm223 = vcmask 195584
  %v225 = vsel %vm223, %v143, 0
  %v228 = vsel %vm223, %v145, 0
  %v231 = vsel %vm223, %v147, 0
  %v234 = vsel %vm223, %v149, 0
  %v237 = vsel %vm223, %v151, 0
  %v240 = vsel %vm223, %v153, 0
  %v243 = vsel %vm223, %v155, 0
  %v246 = vsel %vm223, %v157, 0
  %vm248 = vcmask 1043456
  %v250 = vsel %vm248, %v213, 0
  %252 = vmatprep.subr.bf16.mxu0 0
  %253 = vmatpush1.bf16.msra.mxu0 %v204
  %254 = vmatprep.subr.bf16.mxu0 0
  %255 = vmatpush1.bf16.msra.mxu0 %v205
  %256 = vmatprep.subr.bf16.mxu0 0
  %257 = vmatpush1.bf16.msra.mxu0 %v206
  %258 = vmatprep.subr.bf16.mxu0 0
  %259 = vmatpush1.bf16.msra.mxu0 %v207
  %260 = vmatprep.subr.bf16.mxu0 0
  %261 = vmatpush1.bf16.msra.mxu0 %v208
  %262 = vmatprep.subr.bf16.mxu0 0
  %263 = vmatpush1.bf16.msra.mxu0 %v209
  %264 = vmatprep.subr.bf16.mxu0 0
  %265 = vmatpush1.bf16.msra.mxu0 %v210
  %266 = vmatprep.subr.bf16.mxu0 0
  %267 = vmatpush1.bf16.msra.mxu0 %v211
  %268 = vmatprep.subr.bf16.mxu0 0
  %269 = vmatpush1.bf16.msra.mxu0 %v212
  %270 = vmatprep.subr.bf16.mxu0 0
  %271 = vmatpush1.bf16.msra.mxu0 %v250
  %272 = vmatprep.subr.bf16.mxu0 0
  %273 = vmatpush1.bf16.msra.mxu0 0
  %274 = vmatprep.subr.bf16.mxu0 0
  %275 = vmatpush1.bf16.msra.mxu0 0
  %276 = vmatprep.subr.bf16.mxu0 0
  %277 = vmatpush1.bf16.msra.mxu0 0
  %278 = vmatprep.subr.bf16.mxu0 0
  %279 = vmatpush1.bf16.msra.mxu0 0
  %280 = vmatprep.subr.bf16.mxu0 0
  %281 = vmatpush1.bf16.msra.mxu0 0
  %282 = vmatprep.subr.bf16.mxu0 0
  %283 = vmatpush1.bf16.msra.mxu0 0
  %284 = vmatprep.mubr.bf16.mxu0 %v225
  %285 = vmatmul.mubr.bf16.gmra.mrb[0].mxu0 %v142
  %v286 = vpop.f32.mrb[0].mxu0
  %v287 = vadd.f32 0.0, %v286
  %v288 = vpop.f32.mrb[0].mxu0
  %v289 = vpop.f32.mrb[0].mxu0
  %v290 = vadd.f32 0.0, %v289
  %v291 = vpop.f32.mrb[0].mxu0
  %292 = vmatprep.mubr.bf16.mxu0 %v228
  %293 = vmatmul.mubr.bf16.gmra.mrb[0].mxu0 %v144
  %v294 = vpop.f32.mrb[0].mxu0
  %v295 = vadd.f32 0.0, %v294
  %v296 = vpop.f32.mrb[0].mxu0
  %v297 = vpop.f32.mrb[0].mxu0
  %v298 = vadd.f32 0.0, %v297
  %v299 = vpop.f32.mrb[0].mxu0
  %300 = vmatprep.mubr.bf16.mxu0 %v231
  %301 = vmatmul.mubr.bf16.gmra.mrb[0].mxu0 %v146
  %v302 = vpop.f32.mrb[0].mxu0
  %v303 = vadd.f32 0.0, %v302
  %v304 = vpop.f32.mrb[0].mxu0
  %v305 = vpop.f32.mrb[0].mxu0
  %v306 = vadd.f32 0.0, %v305
  %v307 = vpop.f32.mrb[0].mxu0
  %308 = vmatprep.mubr.bf16.mxu0 %v234
  %309 = vmatmul.mubr.bf16.gmra.mrb[0].mxu0 %v148
  %v310 = vpop.f32.mrb[0].mxu0
  %v311 = vadd.f32 0.0, %v310
  %v312 = vpop.f32.mrb[0].mxu0
  %v313 = vpop.f32.mrb[0].mxu0
  %v314 = vadd.f32 0.0, %v313
  %v315 = vpop.f32.mrb[0].mxu0
  %316 = vmatprep.mubr.bf16.mxu0 %v237
  %317 = vmatmul.mubr.bf16.gmra.mrb[0].mxu0 %v150
  %v318 = vpop.f32.mrb[0].mxu0
  %v319 = vadd.f32 0.0, %v318
  %v320 = vpop.f32.mrb[0].mxu0
  %v321 = vpop.f32.mrb[0].mxu0
  %v322 = vadd.f32 0.0, %v321
  %v323 = vpop.f32.mrb[0].mxu0
  %324 = vmatprep.mubr.bf16.mxu0 %v240
  %325 = vmatmul.mubr.bf16.gmra.mrb[0].mxu0 %v152
  %v326 = vpop.f32.mrb[0].mxu0
  %v327 = vadd.f32 0.0, %v326
  %v328 = vpop.f32.mrb[0].mxu0
  %v329 = vpop.f32.mrb[0].mxu0
  %v330 = vadd.f32 0.0, %v329
  %v331 = vpop.f32.mrb[0].mxu0
  %332 = vmatprep.mubr.bf16.mxu0 %v243
  %333 = vmatmul.mubr.bf16.gmra.mrb[0].mxu0 %v154
  %v334 = vpop.f32.mrb[0].mxu0
  %v335 = vadd.f32 0.0, %v334
  %v336 = vpop.f32.mrb[0].mxu0
  %v337 = vpop.f32.mrb[0].mxu0
  %v338 = vadd.f32 0.0, %v337
  %v339 = vpop.f32.mrb[0].mxu0
  %340 = vmatprep.mubr.bf16.mxu0 %v246
  %341 = vmatmul.mubr.bf16.gmra.mrb[0].mxu0 %v156
  %v342 = vpop.f32.mrb[0].mxu0
  %v343 = vadd.f32 0.0, %v342
  %v344 = vpop.f32.mrb[0].mxu0
  %v345 = vpop.f32.mrb[0].mxu0
  %v346 = vadd.f32 0.0, %v345
  %v347 = vpop.f32.mrb[0].mxu0
  %348 = vdwg.mxu0
  %v349 = vadd.f32 %v43, %v287
  %v350 = vadd.f32 %v44, %v290
  %v351 = vadd.f32 %v45, %v295
  %v352 = vadd.f32 %v46, %v298
  %v353 = vadd.f32 %v47, %v303
  %v354 = vadd.f32 %v48, %v306
  %v355 = vadd.f32 %v49, %v311
  %v356 = vadd.f32 %v50, %v314
  %v357 = vadd.f32 %v51, %v319
  %v358 = vadd.f32 %v52, %v322
  %v359 = vadd.f32 %v53, %v327
  %v360 = vadd.f32 %v54, %v330
  %v361 = vadd.f32 %v55, %v335
  %v362 = vadd.f32 %v56, %v338
  %v363 = vadd.f32 %v57, %v343
  %v364 = vadd.f32 %v58, %v346
  %vm365 = vcmask 523264
  %366 = vst.msk [vmem:[#allocation2] sm:$0xff] %vm365, %v349
  %367 = vst.msk [vmem:[#allocation2 + $0x8] sm:$0xff] %vm365, %v350
  %368 = vst.msk [vmem:[#allocation2 + $0x10] sm:$0xff] %vm365, %v351
  %369 = vst.msk [vmem:[#allocation2 + $0x18] sm:$0xff] %vm365, %v352
  %370 = vst.msk [vmem:[#allocation2 + $0x20] sm:$0xff] %vm365, %v353
  %371 = vst.msk [vmem:[#allocation2 + $0x28] sm:$0xff] %vm365, %v354
  %372 = vst.msk [vmem:[#allocation2 + $0x30] sm:$0xff] %vm365, %v355
  %373 = vst.msk [vmem:[#allocation2 + $0x38] sm:$0xff] %vm365, %v356
  %374 = vst.msk [vmem:[#allocation2 + $0x40] sm:$0xff] %vm365, %v357
  %375 = vst.msk [vmem:[#allocation2 + $0x48] sm:$0xff] %vm365, %v358
  %376 = vst.msk [vmem:[#allocation2 + $0x50] sm:$0xff] %vm365, %v359
  %377 = vst.msk [vmem:[#allocation2 + $0x58] sm:$0xff] %vm365, %v360
  %378 = vst.msk [vmem:[#allocation2 + $0x60] sm:$0xff] %vm365, %v361
  %379 = vst.msk [vmem:[#allocation2 + $0x68] sm:$0xff] %vm365, %v362
  %380 = vst.msk [vmem:[#allocation2 + $0x70] sm:$0xff] %vm365, %v363
  %381 = vst.msk [vmem:[#allocation2 + $0x78] sm:$0xff] %vm365, %v364
  // Predicated region
  $region18: #{_stem_impl.2} parent=0 // pred_check
    %p382 = pneg %p15
  $region19: #{_stem_impl.2} parent=0 // pred_check_branch
    %384 = sbr.rel (%p382) target = $region21
  $region20: #{_stem_impl.2} parent=0 // pred_region
    %v385 = vld [vmem:[#allocation2] sm:$0xff]
    %v386 = vld [vmem:[#allocation2 + $0x8] sm:$0xff]
    %v387 = vld [vmem:[#allocation2 + $0x10] sm:$0xff]
    %v388 = vld [vmem:[#allocation2 + $0x18] sm:$0xff]
    %v389 = vld [vmem:[#allocation2 + $0x20] sm:$0xff]
    %v390 = vld [vmem:[#allocation2 + $0x28] sm:$0xff]
    %v391 = vld [vmem:[#allocation2 + $0x30] sm:$0xff]
    %v392 = vld [vmem:[#allocation2 + $0x38] sm:$0xff]
    %v393 = vld [vmem:[#allocation2 + $0x40] sm:$0xff]
    %v394 = vld [vmem:[#allocation2 + $0x48] sm:$0xff]
    %v395 = vld [vmem:[#allocation2 + $0x50] sm:$0xff]
    %v396 = vld [vmem:[#allocation2 + $0x58] sm:$0xff]
    %v397 = vld [vmem:[#allocation2 + $0x60] sm:$0xff]
    %v398 = vld [vmem:[#allocation2 + $0x68] sm:$0xff]
    %v399 = vld [vmem:[#allocation2 + $0x70] sm:$0xff]
    %v400 = vld [vmem:[#allocation2 + $0x78] sm:$0xff]
    %v401 = vmax.f32 %v385, 0.0
    %v402 = vmax.f32 %v386, 0.0
    %v403 = vmax.f32 %v387, 0.0
    %v404 = vmax.f32 %v388, 0.0
    %v405 = vmax.f32 %v389, 0.0
    %v406 = vmax.f32 %v390, 0.0
    %v407 = vmax.f32 %v391, 0.0
    %v408 = vmax.f32 %v392, 0.0
    %v409 = vmax.f32 %v393, 0.0
    %v410 = vmax.f32 %v394, 0.0
    %v411 = vmax.f32 %v395, 0.0
    %v412 = vmax.f32 %v396, 0.0
    %v413 = vmax.f32 %v397, 0.0
    %v414 = vmax.f32 %v398, 0.0
    %v415 = vmax.f32 %v399, 0.0
    %v416 = vmax.f32 %v400, 0.0
    %v417 = vpack.c.bf16 %v402, %v401
    %v418 = vpack.c.bf16 %v404, %v403
    %v419 = vpack.c.bf16 %v406, %v405
    %v420 = vpack.c.bf16 %v408, %v407
    %v421 = vpack.c.bf16 %v410, %v409
    %v422 = vpack.c.bf16 %v412, %v411
    %v423 = vpack.c.bf16 %v414, %v413
    %v424 = vpack.c.bf16 %v416, %v415
    %v433 = vunpack.c.l.b16 %v417
    %v434 = vunpack.c.h.b16 %v417
    %v435 = vunpack.c.l.b16 %v418
    %v436 = vunpack.c.h.b16 %v418
    %v437 = vunpack.c.l.b16 %v419
    %v438 = vunpack.c.h.b16 %v419
    %v439 = vunpack.c.l.b16 %v420
    %v440 = vunpack.c.h.b16 %v420
    %v441 = vunpack.c.l.b16 %v421
    %v442 = vunpack.c.h.b16 %v421
    %v443 = vunpack.c.l.b16 %v422
    %v444 = vunpack.c.h.b16 %v422
    %v445 = vunpack.c.l.b16 %v423
    %v446 = vunpack.c.h.b16 %v423
    %v447 = vunpack.c.l.b16 %v424
    %v448 = vunpack.c.h.b16 %v424
    %v449 = vpack.c.b16 %v433, %v433
    %v450 = vpack.c.b16 %v434, %v434
    %v451 = vpack.c.b16 %v435, %v435
    %v452 = vpack.c.b16 %v436, %v436
    %v453 = vpack.c.b16 %v437, %v437
    %v454 = vpack.c.b16 %v438, %v438
    %v455 = vpack.c.b16 %v439, %v439
    %v456 = vpack.c.b16 %v440, %v440
    %v457 = vpack.c.b16 %v441, %v441
    %v458 = vpack.c.b16 %v442, %v442
    %v459 = vpack.c.b16 %v443, %v443
    %v460 = vpack.c.b16 %v444, %v444
    %v461 = vpack.c.b16 %v445, %v445
    %v462 = vpack.c.b16 %v446, %v446
    %v463 = vpack.c.b16 %v447, %v447
    %v464 = vpack.c.b16 %v448, %v448
    %vm481 = vcmask 519168
    %482 = vst.msk [vmem:[%s3] sm:$0xf] %vm481, %v449
    %483 = vst.msk [vmem:[%s3 + $0x4] sm:$0xf] %vm481, %v450
    %484 = vst.msk [vmem:[%s3 + $0x8] sm:$0xf] %vm481, %v451
    %485 = vst.msk [vmem:[%s3 + $0xc] sm:$0xf] %vm481, %v452
    %486 = vst.msk [vmem:[%s3 + $0x10] sm:$0xf] %vm481, %v453
    %487 = vst.msk [vmem:[%s3 + $0x14] sm:$0xf] %vm481, %v454
    %488 = vst.msk [vmem:[%s3 + $0x18] sm:$0xf] %vm481, %v455
    %489 = vst.msk [vmem:[%s3 + $0x1c] sm:$0xf] %vm481, %v456
    %490 = vst.msk [vmem:[%s3 + $0x20] sm:$0xf] %vm481, %v457
    %491 = vst.msk [vmem:[%s3 + $0x24] sm:$0xf] %vm481, %v458
    %492 = vst.msk [vmem:[%s3 + $0x28] sm:$0xf] %vm481, %v459
    %493 = vst.msk [vmem:[%s3 + $0x2c] sm:$0xf] %vm481, %v460
    %494 = vst.msk [vmem:[%s3 + $0x30] sm:$0xf] %vm481, %v461
    %495 = vst.msk [vmem:[%s3 + $0x34] sm:$0xf] %vm481, %v462
    %496 = vst.msk [vmem:[%s3 + $0x38] sm:$0xf] %vm481, %v463
    %497 = vst.msk [vmem:[%s3 + $0x3c] sm:$0xf] %vm481, %v464
  $region21: #{_stem_impl.2} parent=0 // pred_fallthru
    _
  // Predicated region
  $region22: #{_stem_impl.2} parent=0 // pred_check
    _
  $region23: #{_stem_impl.2} parent=0 // pred_check_branch
    %499 = sbr.rel (0) target = $region25
  $region24: #{_stem_impl.2} parent=0 // pred_region
    _
  $region25: #{_stem_impl.2} parent=0 // pred_fallthru
    _
  // Predicated region
  $region26: #{_stem_impl.2} parent=0 // pred_check
    _
  $region27: #{_stem_impl.2} parent=0 // pred_check_branch
    %501 = sbr.rel (0) target = $region29
  $region28: #{_stem_impl.2} parent=0 // pred_region
    _
  $region29: #{_stem_impl.2} parent=0 // pred_fallthru
    _

</llo_original>
